<compile_context>
chip_gen: v7x
topology: tpu7x:2x2x1
jax: 0.10.0
libtpu: 0.0.40
codegen_flags: <defaults>
</compile_context>

<pallas_src>
import jax
import jax.numpy as jnp
from jax.experimental import pallas as pl
from jax.experimental.pallas import tpu as pltpu

N_IN = 28 * 28   # 784
N_H1 = 50
N_H2 = 100
N_OUT = 10

# MXU/lane-friendly padded feature dims (zero padding -> exact same math).
H1_P = 128
H2_P = 128
OUT_P = 128

# x tile @ bf16: 1024*784*2 B ~= 1.6 MiB; x2 double-buffering + weights + out tile << 32 MiB.
MAX_TILE_B = 1024

# TODO(synk): the 784 (K) axis of layer 1 is left un-padded (not a multiple of 128);
# padding it to 896 in the wrapper would add ~14% HBM traffic for x, so we skip it.


def _round_up(n, m):
    return ((n + m - 1) // m) * m


def fashion_net_kernel(x_ref, w1_ref, b1_ref, w2_ref, b2_ref, w3_ref, b3_ref, o_ref):
    # Layer 1: Linear(784 -> 128 [=50 zero-padded]) + ReLU. bf16 MXU operands, f32 accum.
    h1 = jnp.dot(x_ref[...], w1_ref[...], preferred_element_type=jnp.float32)
    h1 = jnp.maximum(h1 + b1_ref[...], 0.0)                       # f32 epilogue (VPU)

    # Layer 2: Linear(128 -> 128 [=100 zero-padded]) + ReLU.
    h2 = jnp.dot(h1.astype(jnp.bfloat16), w2_ref[...],
                 preferred_element_type=jnp.float32)
    h2 = jnp.maximum(h2 + b2_ref[...], 0.0)

    # Layer 3: Linear(128 -> 128 [=10 zero-padded]) + Sigmoid, lane-dense 128-wide store.
    z3 = jnp.dot(h2.astype(jnp.bfloat16), w3_ref[...],
                 preferred_element_type=jnp.float32)
    o_ref[...] = jax.nn.sigmoid(z3 + b3_ref[...]).astype(o_ref.dtype)


def _pad2d(a, rows, cols, dtype):
    r, c = a.shape
    return jnp.pad(a, ((0, rows - r), (0, cols - c))).astype(dtype)


def fashion_net_forward(x, params):
    """x: (B, 784) float32. params: dict of w1,b1,w2,b2,w3,b3 (unpadded, f32)."""
    B = x.shape[0]
    tile_b = min(MAX_TILE_B, _round_up(B, 16))   # multiple of 16 for bf16 sublane packing
    b_pad = _round_up(B, tile_b)

    # Layout plumbing (cheap, one-time-size weight pads + bf16 cast of x).
    x_p = jnp.pad(x, ((0, b_pad - B), (0, 0))).astype(jnp.bfloat16)
    w1 = _pad2d(params["w1"], N_IN, H1_P, jnp.bfloat16)
    b1 = _pad2d(params["b1"], 1, H1_P, jnp.float32)
    w2 = _pad2d(params["w2"], H1_P, H2_P, jnp.bfloat16)
    b2 = _pad2d(params["b2"], 1, H2_P, jnp.float32)
    w3 = _pad2d(params["w3"], H2_P, OUT_P, jnp.bfloat16)
    b3 = _pad2d(params["b3"], 1, OUT_P, jnp.float32)

    # Weights/biases: same block for every grid step -> stay resident in VMEM.
    resident = lambda shape: pl.BlockSpec(shape, lambda i: (0, 0))

    out = pl.pallas_call(
        fashion_net_kernel,
        out_shape=jax.ShapeDtypeStruct((b_pad, OUT_P), jnp.float32),
        grid=(b_pad // tile_b,),
        in_specs=[
            pl.BlockSpec((tile_b, N_IN), lambda i: (i, 0)),   # x: streamed, double-buffered
            resident((N_IN, H1_P)), resident((1, H1_P)),
            resident((H1_P, H2_P)), resident((1, H2_P)),
            resident((H2_P, OUT_P)), resident((1, OUT_P)),
        ],
        out_specs=pl.BlockSpec((tile_b, OUT_P), lambda i: (i, 0)),
        compiler_params=pltpu.CompilerParams(
            dimension_semantics=("parallel",),   # shards batch tiles across v7x's 2 TCs
            vmem_limit_bytes=32 << 20,
        ),
    )(x_p, w1, b1, w2, b2, w3, b3)

    return out[:B, :N_OUT]


def init_params(key):
    """Deterministic init mirroring PyTorch default Linear init
    (uniform(-1/sqrt(fan_in), 1/sqrt(fan_in)))."""
    ks = jax.random.split(key, 6)

    def lin(kw, kb, fan_in, fan_out):
        bound = 1.0 / jnp.sqrt(float(fan_in))
        w = jax.random.uniform(kw, (fan_in, fan_out), jnp.float32, -bound, bound)
        b = jax.random.uniform(kb, (1, fan_out), jnp.float32, -bound, bound)
        return w, b

    w1, b1 = lin(ks[0], ks[1], N_IN, N_H1)
    w2, b2 = lin(ks[2], ks[3], N_H1, N_H2)
    w3, b3 = lin(ks[4], ks[5], N_H2, N_OUT)
    return {"w1": w1, "b1": b1, "w2": w2, "b2": b2, "w3": w3, "b3": b3}


def reference_forward(x, p):
    h1 = jnp.maximum(x @ p["w1"] + p["b1"], 0.0)
    h2 = jnp.maximum(h1 @ p["w2"] + p["b2"], 0.0)
    return jax.nn.sigmoid(h2 @ p["w3"] + p["b3"])


if __name__ == "__main__":
    key = jax.random.PRNGKey(0)
    k_x, k_p = jax.random.split(key)

    B = 8  # small batch of flattened 28x28 images, as in the PyTorch module
    x = jax.random.normal(k_x, (B, N_IN), dtype=jnp.float32)
    params = init_params(k_p)

    out = fashion_net_forward(x, params)
    out = jax.block_until_ready(out)

    ref = reference_forward(x, params)
    assert out.shape == (B, N_OUT)
    # bf16 matmul operands (f32 accumulation) -> loosened tolerance vs. pure-f32 reference.
    assert jnp.allclose(out, ref, atol=2e-2, rtol=0.0), float(jnp.max(jnp.abs(out - ref)))

    print("KERNEL_OK")
</pallas_src>

<mosaic_0001>
module attributes {stable_mosaic.version = 11 : i64} {
  func.func @fashion_net_kernel(%arg0: i32, %arg1: memref<16x784xbf16, #tpu.memory_space<vmem>>, %arg2: memref<784x128xbf16, #tpu.memory_space<vmem>>, %arg3: memref<1x128xf32, #tpu.memory_space<vmem>>, %arg4: memref<128x128xbf16, #tpu.memory_space<vmem>>, %arg5: memref<1x128xf32, #tpu.memory_space<vmem>>, %arg6: memref<128x128xbf16, #tpu.memory_space<vmem>>, %arg7: memref<1x128xf32, #tpu.memory_space<vmem>>, %arg8: memref<16x128xf32, #tpu.memory_space<vmem>>) attributes {dimension_semantics = [#tpu.dimension_semantics<parallel>], iteration_bounds = array<i64: 1>, scalar_prefetch = 0 : i64, scratch_operands = 0 : i64, tpu.core_type = #tpu.core_type<tc>, window_params = [{transform_indices = @transform_0, window_bounds = array<i64: 16, 784>}, {pipeline_mode = #tpu.pipeline_mode<synchronous>, transform_indices = @transform_1, window_bounds = array<i64: 784, 128>}, {pipeline_mode = #tpu.pipeline_mode<synchronous>, transform_indices = @transform_2, window_bounds = array<i64: 1, 128>}, {pipeline_mode = #tpu.pipeline_mode<synchronous>, transform_indices = @transform_3, window_bounds = array<i64: 128, 128>}, {pipeline_mode = #tpu.pipeline_mode<synchronous>, transform_indices = @transform_4, window_bounds = array<i64: 1, 128>}, {pipeline_mode = #tpu.pipeline_mode<synchronous>, transform_indices = @transform_5, window_bounds = array<i64: 128, 128>}, {pipeline_mode = #tpu.pipeline_mode<synchronous>, transform_indices = @transform_6, window_bounds = array<i64: 1, 128>}, {transform_indices = @transform_7, window_bounds = array<i64: 16, 128>}]} {
    %c0 = arith.constant 0 : index
    %c0_0 = arith.constant 0 : index
    %0 = vector.load %arg1[%c0, %c0_0] : memref<16x784xbf16, #tpu.memory_space<vmem>>, vector<16x784xbf16>
    %c0_1 = arith.constant 0 : index
    %c0_2 = arith.constant 0 : index
    %1 = vector.load %arg2[%c0_1, %c0_2] : memref<784x128xbf16, #tpu.memory_space<vmem>>, vector<784x128xbf16>
    %cst = arith.constant dense<0.000000e+00> : vector<16x128xf32>
    %2 = tpu.matmul %0, %1, %cst {dimension_numbers = #tpu.dot_dimension_numbers<[1], [0], [0], [1], [0, 0, 1, 1], [], []>} : vector<16x784xbf16>, vector<784x128xbf16>, vector<16x128xf32> -> vector<16x128xf32>
    %c0_3 = arith.constant 0 : index
    %c0_4 = arith.constant 0 : index
    %3 = vector.load %arg3[%c0_3, %c0_4] : memref<1x128xf32, #tpu.memory_space<vmem>>, vector<1x128xf32>
    %4 = vector.broadcast %3 : vector<1x128xf32> to vector<16x128xf32>
    %5 = arith.addf %2, %4 : vector<16x128xf32>
    %cst_5 = arith.constant 0.000000e+00 : f32
    %6 = vector.broadcast %cst_5 : f32 to vector<16x128xf32>
    %7 = arith.maximumf %5, %6 : vector<16x128xf32>
    %8 = arith.truncf %7 : vector<16x128xf32> to vector<16x128xbf16>
    %c0_6 = arith.constant 0 : index
    %c0_7 = arith.constant 0 : index
    %9 = vector.load %arg4[%c0_6, %c0_7] : memref<128x128xbf16, #tpu.memory_space<vmem>>, vector<128x128xbf16>
    %cst_8 = arith.constant dense<0.000000e+00> : vector<16x128xf32>
    %10 = tpu.matmul %8, %9, %cst_8 {dimension_numbers = #tpu.dot_dimension_numbers<[1], [0], [0], [1], [0, 0, 1, 1], [], []>} : vector<16x128xbf16>, vector<128x128xbf16>, vector<16x128xf32> -> vector<16x128xf32>
    %c0_9 = arith.constant 0 : index
    %c0_10 = arith.constant 0 : index
    %11 = vector.load %arg5[%c0_9, %c0_10] : memref<1x128xf32, #tpu.memory_space<vmem>>, vector<1x128xf32>
    %12 = vector.broadcast %11 : vector<1x128xf32> to vector<16x128xf32>
    %13 = arith.addf %10, %12 : vector<16x128xf32>
    %cst_11 = arith.constant 0.000000e+00 : f32
    %14 = vector.broadcast %cst_11 : f32 to vector<16x128xf32>
    %15 = arith.maximumf %13, %14 : vector<16x128xf32>
    %16 = arith.truncf %15 : vector<16x128xf32> to vector<16x128xbf16>
    %c0_12 = arith.constant 0 : index
    %c0_13 = arith.constant 0 : index
    %17 = vector.load %arg6[%c0_12, %c0_13] : memref<128x128xbf16, #tpu.memory_space<vmem>>, vector<128x128xbf16>
    %cst_14 = arith.constant dense<0.000000e+00> : vector<16x128xf32>
    %18 = tpu.matmul %16, %17, %cst_14 {dimension_numbers = #tpu.dot_dimension_numbers<[1], [0], [0], [1], [0, 0, 1, 1], [], []>} : vector<16x128xbf16>, vector<128x128xbf16>, vector<16x128xf32> -> vector<16x128xf32>
    %c0_15 = arith.constant 0 : index
    %c0_16 = arith.constant 0 : index
    %19 = vector.load %arg7[%c0_15, %c0_16] : memref<1x128xf32, #tpu.memory_space<vmem>>, vector<1x128xf32>
    %20 = vector.broadcast %19 : vector<1x128xf32> to vector<16x128xf32>
    %21 = arith.addf %18, %20 : vector<16x128xf32>
    %22 = arith.negf %21 : vector<16x128xf32>
    %23 = math.exp %22 : vector<16x128xf32>
    %cst_17 = arith.constant 1.000000e+00 : f32
    %24 = vector.broadcast %cst_17 : f32 to vector<16x128xf32>
    %25 = arith.addf %24, %23 : vector<16x128xf32>
    %26 = arith.divf %24, %25 : vector<16x128xf32>
    %c0_18 = arith.constant 0 : index
    %c0_19 = arith.constant 0 : index
    %27 = vector.load %arg8[%c0_18, %c0_19] : memref<16x128xf32, #tpu.memory_space<vmem>>, vector<16x128xf32>
    tpu.vector_store %arg8[%c0_18, %c0_19], %26 {strides = array<i32>} : memref<16x128xf32, #tpu.memory_space<vmem>>, vector<16x128xf32>,
    return
  }
  func.func @transform_0(%arg0: i32) -> (i32, i32) {
    %c0_i32 = arith.constant 0 : i32
    %c0_i32_0 = arith.constant 0 : i32
    return %arg0, %c0_i32 : i32, i32
  }
  func.func @transform_1(%arg0: i32) -> (i32, i32) {
    %c0_i32 = arith.constant 0 : i32
    %c0_i32_0 = arith.constant 0 : i32
    %c0_i32_1 = arith.constant 0 : i32
    return %c0_i32, %c0_i32_0 : i32, i32
  }
  func.func @transform_2(%arg0: i32) -> (i32, i32) {
    %c0_i32 = arith.constant 0 : i32
    %c0_i32_0 = arith.constant 0 : i32
    %c0_i32_1 = arith.constant 0 : i32
    return %c0_i32, %c0_i32_0 : i32, i32
  }
  func.func @transform_3(%arg0: i32) -> (i32, i32) {
    %c0_i32 = arith.constant 0 : i32
    %c0_i32_0 = arith.constant 0 : i32
    %c0_i32_1 = arith.constant 0 : i32
    return %c0_i32, %c0_i32_0 : i32, i32
  }
  func.func @transform_4(%arg0: i32) -> (i32, i32) {
    %c0_i32 = arith.constant 0 : i32
    %c0_i32_0 = arith.constant 0 : i32
    %c0_i32_1 = arith.constant 0 : i32
    return %c0_i32, %c0_i32_0 : i32, i32
  }
  func.func @transform_5(%arg0: i32) -> (i32, i32) {
    %c0_i32 = arith.constant 0 : i32
    %c0_i32_0 = arith.constant 0 : i32
    %c0_i32_1 = arith.constant 0 : i32
    return %c0_i32, %c0_i32_0 : i32, i32
  }
  func.func @transform_6(%arg0: i32) -> (i32, i32) {
    %c0_i32 = arith.constant 0 : i32
    %c0_i32_0 = arith.constant 0 : i32
    %c0_i32_1 = arith.constant 0 : i32
    return %c0_i32, %c0_i32_0 : i32, i32
  }
  func.func @transform_7(%arg0: i32) -> (i32, i32) {
    %c0_i32 = arith.constant 0 : i32
    %c0_i32_0 = arith.constant 0 : i32
    return %arg0, %c0_i32 : i32, i32
  }
}

</mosaic_0001>

<llo_original>
// kernel: tpu_custom_call.1
$region0: #{tpu_custom_call.1}
  #allocation0 [shape = 'u32[]', space=smem, size = 0x4, offset = 0x4, fixed_abs, tag = 'smem constant byte address 0x4 - core index']
  #allocation1 [shape = 'u32[144,128]{1,0:T(1,128)}', space=vmem, size = 0x12000, scoped, tag = 'internal scratch']
  %s0 = inlined_call_operand.hbm [shape: bf16[16,784], index: 0, kind: input, shape index: {}]
  %s1 = inlined_call_operand.hbm [shape: bf16[784,128], index: 1, kind: input, shape index: {}]
  %s2 = inlined_call_operand.vmem [shape: f32[1,128], index: 2, kind: input, shape index: {}]
  %s3 = inlined_call_operand.hbm [shape: bf16[128,128], index: 3, kind: input, shape index: {}]
  %s4 = inlined_call_operand.vmem [shape: f32[1,128], index: 4, kind: input, shape index: {}]
  %s5 = inlined_call_operand.hbm [shape: bf16[128,128], index: 5, kind: input, shape index: {}]
  %s6 = inlined_call_operand.vmem [shape: f32[1,128], index: 6, kind: input, shape index: {}]
  %s7 = inlined_call_operand.hbm [shape: f32[16,128], index: 7, kind: output, shape index: {}]
  %s8 = sld [smem:[#allocation0]]
  $region54: #{tpu_custom_call.1} parent=0
    _
  %s10 = ssub.s32 1, %s8
  %s11 = scalar_select 0, %s10, %s8
  $region1: #{tpu_custom_call.1} parent=0
    #allocation2 [shape = 'u8[28672]{0}', space=vmem, size = 0x7000, scoped, tag = 'input window, operand 0, single buffered']
    #allocation3 [shape = 's32[1]{0}', space=sflag, size = 0x4, scoped, tag = 'scoped memory for tpu_custom_call.1']
    #allocation4 [shape = 's32[1]{0}', space=sflag, size = 0x4, scoped, tag = 'scoped memory for tpu_custom_call.1']
    #allocation5 [shape = 'u8[200704]{0}', space=vmem, size = 0x31000, scoped, tag = 'input window, operand 1, single buffered']
    #allocation6 [shape = 's32[1]{0}', space=sflag, size = 0x4, scoped, tag = 'scoped memory for tpu_custom_call.1']
    #allocation7 [shape = 'u8[32768]{0}', space=vmem, size = 0x8000, scoped, tag = 'input window, operand 3, single buffered']
    #allocation8 [shape = 'u8[32768]{0}', space=vmem, size = 0x8000, scoped, tag = 'input window, operand 5, single buffered']
    #allocation9 [shape = 's32[1]{0}', space=sflag, size = 0x4, scoped, tag = 'scoped memory for tpu_custom_call.1']
    #allocation10 [shape = 'u8[8192]{0}', space=vmem, size = 0x2000, scoped, tag = 'output window, operand 0, single buffered']
    %12 = vsyncpa [#allocation3], 0
    %13 = vsyncpa [#allocation6], 0
    %14 = vsyncpa [#allocation9], 0
    %15 = vsyncpa [#allocation4], 0
    // Predicated region
    $region2: #{tpu_custom_call.1} parent=1 // pred_check
      _
    $region3: #{tpu_custom_call.1} parent=1 // pred_check_branch
      %17 = sbr.rel (0) target = $region5
    $region4: #{tpu_custom_call.1} parent=1 // pred_region
      %s19 = ssub.s32 896, 896
      %20 = vsyncadd [#allocation3], %s19
      %s21 = sshll.u32 [#allocation2], 4
      %s22 = int_to_ptr.vmem [resolvable:$true] %s21
      %27 = dma.hbm_to_vmem [thread:$0]  %s0, 896, %s22, [#allocation3], 448, 448, 28
    $region5: #{tpu_custom_call.1} parent=1 // pred_fallthru
      _
    // Predicated region
    $region6: #{tpu_custom_call.1} parent=1 // pred_check
      _
    $region7: #{tpu_custom_call.1} parent=1 // pred_check_branch
      %29 = sbr.rel (0) target = $region9
    $region8: #{tpu_custom_call.1} parent=1 // pred_region
      %s31 = ssub.s32 6272, 6272
      %32 = vsyncadd [#allocation6], %s31
      %s33 = sshll.u32 [#allocation5], 4
      %s34 = int_to_ptr.vmem [resolvable:$true] %s33
      %39 = dma.hbm_to_vmem [thread:$0]  %s1, 6272, %s34, [#allocation6], 64, 64, 4
    $region9: #{tpu_custom_call.1} parent=1 // pred_fallthru
      _
    // Predicated region
    $region10: #{tpu_custom_call.1} parent=1 // pred_check
      _
    $region11: #{tpu_custom_call.1} parent=1 // pred_check_branch
      %41 = sbr.rel (0) target = $region13
    $region12: #{tpu_custom_call.1} parent=1 // pred_region
      _
    $region13: #{tpu_custom_call.1} parent=1 // pred_fallthru
      _
    // Predicated region
    $region14: #{tpu_custom_call.1} parent=1 // pred_check
      _
    $region15: #{tpu_custom_call.1} parent=1 // pred_check_branch
      %43 = sbr.rel (0) target = $region17
    $region16: #{tpu_custom_call.1} parent=1 // pred_region
      %s45 = ssub.s32 1024, 1024
      %46 = vsyncadd [#allocation6], %s45
      %s47 = sshll.u32 [#allocation7], 4
      %s48 = int_to_ptr.vmem [resolvable:$true] %s47
      %53 = dma.hbm_to_vmem [thread:$0]  %s3, 1024, %s48, [#allocation6], 64, 64, 4
    $region17: #{tpu_custom_call.1} parent=1 // pred_fallthru
      _
    // Predicated region
    $region18: #{tpu_custom_call.1} parent=1 // pred_check
      _
    $region19: #{tpu_custom_call.1} parent=1 // pred_check_branch
      %55 = sbr.rel (0) target = $region21
    $region20: #{tpu_custom_call.1} parent=1 // pred_region
      _
    $region21: #{tpu_custom_call.1} parent=1 // pred_fallthru
      _
    // Predicated region
    $region22: #{tpu_custom_call.1} parent=1 // pred_check
      _
    $region23: #{tpu_custom_call.1} parent=1 // pred_check_branch
      %57 = sbr.rel (0) target = $region25
    $region24: #{tpu_custom_call.1} parent=1 // pred_region
      %s59 = ssub.s32 1024, 1024
      %60 = vsyncadd [#allocation9], %s59
      %s61 = sshll.u32 [#allocation8], 4
      %s62 = int_to_ptr.vmem [resolvable:$true] %s61
      %67 = dma.hbm_to_vmem [thread:$0]  %s5, 1024, %s62, [#allocation9], 64, 64, 4
    $region25: #{tpu_custom_call.1} parent=1 // pred_fallthru
      _
    // Predicated region
    $region26: #{tpu_custom_call.1} parent=1 // pred_check
      _
    $region27: #{tpu_custom_call.1} parent=1 // pred_check_branch
      %69 = sbr.rel (0) target = $region29
    $region28: #{tpu_custom_call.1} parent=1 // pred_region
      _
    $region29: #{tpu_custom_call.1} parent=1 // pred_fallthru
      _
    // Predicated region
    $region30: #{tpu_custom_call.1} parent=1 // pred_check
      _
    $region31: #{tpu_custom_call.1} parent=1 // pred_check_branch
      %71 = sbr.rel (0) target = $region33
    $region32: #{tpu_custom_call.1} parent=1 // pred_region
      %72 = dma.done [#allocation3], 896
    $region33: #{tpu_custom_call.1} parent=1 // pred_fallthru
      _
    // Predicated region
    $region34: #{tpu_custom_call.1} parent=1 // pred_check
      _
    $region35: #{tpu_custom_call.1} parent=1 // pred_check_branch
      %74 = sbr.rel (0) target = $region37
    $region36: #{tpu_custom_call.1} parent=1 // pred_region
      %75 = dma.done [#allocation6], 6272
    $region37: #{tpu_custom_call.1} parent=1 // pred_fallthru
      _
    // Predicated region
    $region38: #{tpu_custom_call.1} parent=1 // pred_check
      _
    $region39: #{tpu_custom_call.1} parent=1 // pred_check_branch
      %77 = sbr.rel (0) target = $region41
    $region40: #{tpu_custom_call.1} parent=1 // pred_region
      %78 = dma.done [#allocation6], 1024
    $region41: #{tpu_custom_call.1} parent=1 // pred_fallthru
      _
    // Predicated region
    $region42: #{tpu_custom_call.1} parent=1 // pred_check
      _
    $region43: #{tpu_custom_call.1} parent=1 // pred_check_branch
      %80 = sbr.rel (0) target = $region45
    $region44: #{tpu_custom_call.1} parent=1 // pred_region
      %81 = dma.done [#allocation9], 1024
    $region45: #{tpu_custom_call.1} parent=1 // pred_fallthru
      _
    %v83 = vld [vmem:[#allocation2] sm:$0xff]
    %v84 = vld [vmem:[#allocation2 + $0x8] sm:$0xff]
    %v85 = vld [vmem:[#allocation2 + $0x10] sm:$0xff]
    %v86 = vld [vmem:[#allocation2 + $0x18] sm:$0xf]
    %v87 = vld [vmem:[#allocation2 + $0x1c] sm:$0xff]
    %v88 = vld [vmem:[#allocation2 + $0x24] sm:$0xff]
    %v89 = vld [vmem:[#allocation2 + $0x2c] sm:$0xff]
    %v90 = vld [vmem:[#allocation2 + $0x34] sm:$0xf]
    %v91 = vld [vmem:[#allocation5] sm:$0xf]
    %v92 = vld [vmem:[#allocation5 + $0x4] sm:$0xf]
    %v93 = vld [vmem:[#allocation5 + $0x8] sm:$0xf]
    %v94 = vld [vmem:[#allocation5 + $0xc] sm:$0xf]
    %v95 = vld [vmem:[#allocation5 + $0x10] sm:$0xf]
    %v96 = vld [vmem:[#allocation5 + $0x14] sm:$0xf]
    %v97 = vld [vmem:[#allocation5 + $0x18] sm:$0xf]
    %v98 = vld [vmem:[#allocation5 + $0x1c] sm:$0xf]
    %v99 = vld [vmem:[#allocation5 + $0x20] sm:$0xf]
    %v100 = vld [vmem:[#allocation5 + $0x24] sm:$0xf]
    %v101 = vld [vmem:[#allocation5 + $0x28] sm:$0xf]
    %v102 = vld [vmem:[#allocation5 + $0x2c] sm:$0xf]
    %v103 = vld [vmem:[#allocation5 + $0x30] sm:$0xf]
    %v104 = vld [vmem:[#allocation5 + $0x34] sm:$0xf]
    %v105 = vld [vmem:[#allocation5 + $0x38] sm:$0xf]
    %v106 = vld [vmem:[#allocation5 + $0x3c] sm:$0xf]
    %v107 = vld [vmem:[#allocation5 + $0x40] sm:$0xf]
    %v108 = vld [vmem:[#allocation5 + $0x44] sm:$0xf]
    %v109 = vld [vmem:[#allocation5 + $0x48] sm:$0xf]
    %v110 = vld [vmem:[#allocation5 + $0x4c] sm:$0xf]
    %v111 = vld [vmem:[#allocation5 + $0x50] sm:$0xf]
    %v112 = vld [vmem:[#allocation5 + $0x54] sm:$0xf]
    %v113 = vld [vmem:[#allocation5 + $0x58] sm:$0xf]
    %v114 = vld [vmem:[#allocation5 + $0x5c] sm:$0xf]
    %v115 = vld [vmem:[#allocation5 + $0x60] sm:$0xf]
    %v116 = vld [vmem:[#allocation5 + $0x64] sm:$0xf]
    %v117 = vld [vmem:[#allocation5 + $0x68] sm:$0xf]
    %v118 = vld [vmem:[#allocation5 + $0x6c] sm:$0xf]
    %v119 = vld [vmem:[#allocation5 + $0x70] sm:$0xf]
    %v120 = vld [vmem:[#allocation5 + $0x74] sm:$0xf]
    %v121 = vld [vmem:[#allocation5 + $0x78] sm:$0xf]
    %v122 = vld [vmem:[#allocation5 + $0x7c] sm:$0xf]
    %v123 = vld [vmem:[#allocation5 + $0x80] sm:$0xf]
    %v124 = vld [vmem:[#allocation5 + $0x84] sm:$0xf]
    %v125 = vld [vmem:[#allocation5 + $0x88] sm:$0xf]
    %v126 = vld [vmem:[#allocation5 + $0x8c] sm:$0xf]
    %v127 = vld [vmem:[#allocation5 + $0x90] sm:$0xf]
    %v128 = vld [vmem:[#allocation5 + $0x94] sm:$0xf]
    %v129 = vld [vmem:[#allocation5 + $0x98] sm:$0xf]
    %v130 = vld [vmem:[#allocation5 + $0x9c] sm:$0xf]
    %v131 = vld [vmem:[#allocation5 + $0xa0] sm:$0xf]
    %v132 = vld [vmem:[#allocation5 + $0xa4] sm:$0xf]
    %v133 = vld [vmem:[#allocation5 + $0xa8] sm:$0xf]
    %v134 = vld [vmem:[#allocation5 + $0xac] sm:$0xf]
    %v135 = vld [vmem:[#allocation5 + $0xb0] sm:$0xf]
    %v136 = vld [vmem:[#allocation5 + $0xb4] sm:$0xf]
    %v137 = vld [vmem:[#allocation5 + $0xb8] sm:$0xf]
    %v138 = vld [vmem:[#allocation5 + $0xbc] sm:$0xf]
    %v139 = vld [vmem:[#allocation5 + $0xc0] sm:$0xf]
    %v140 = vld [vmem:[#allocation5 + $0xc4] sm:$0xf]
    %v141 = vld [vmem:[#allocation5 + $0xc8] sm:$0xf]
    %v142 = vld [vmem:[#allocation5 + $0xcc] sm:$0xf]
    %v143 = vld [vmem:[#allocation5 + $0xd0] sm:$0xf]
    %v144 = vld [vmem:[#allocation5 + $0xd4] sm:$0xf]
    %v145 = vld [vmem:[#allocation5 + $0xd8] sm:$0xf]
    %v146 = vld [vmem:[#allocation5 + $0xdc] sm:$0xf]
    %v147 = vld [vmem:[#allocation5 + $0xe0] sm:$0xf]
    %v148 = vld [vmem:[#allocation5 + $0xe4] sm:$0xf]
    %v149 = vld [vmem:[#allocation5 + $0xe8] sm:$0xf]
    %v150 = vld [vmem:[#allocation5 + $0xec] sm:$0xf]
    %v151 = vld [vmem:[#allocation5 + $0xf0] sm:$0xf]
    %v152 = vld [vmem:[#allocation5 + $0xf4] sm:$0xf]
    %v153 = vld [vmem:[#allocation5 + $0xf8] sm:$0xf]
    %v154 = vld [vmem:[#allocation5 + $0xfc] sm:$0xf]
    %v155 = vld [vmem:[#allocation5 + $0x100] sm:$0xf]
    %v156 = vld [vmem:[#allocation5 + $0x104] sm:$0xf]
    %v157 = vld [vmem:[#allocation5 + $0x108] sm:$0xf]
    %v158 = vld [vmem:[#allocation5 + $0x10c] sm:$0xf]
    %v159 = vld [vmem:[#allocation5 + $0x110] sm:$0xf]
    %v160 = vld [vmem:[#allocation5 + $0x114] sm:$0xf]
    %v161 = vld [vmem:[#allocation5 + $0x118] sm:$0xf]
    %v162 = vld [vmem:[#allocation5 + $0x11c] sm:$0xf]
    %v163 = vld [vmem:[#allocation5 + $0x120] sm:$0xf]
    %v164 = vld [vmem:[#allocation5 + $0x124] sm:$0xf]
    %v165 = vld [vmem:[#allocation5 + $0x128] sm:$0xf]
    %v166 = vld [vmem:[#allocation5 + $0x12c] sm:$0xf]
    %v167 = vld [vmem:[#allocation5 + $0x130] sm:$0xf]
    %v168 = vld [vmem:[#allocation5 + $0x134] sm:$0xf]
    %v169 = vld [vmem:[#allocation5 + $0x138] sm:$0xf]
    %v170 = vld [vmem:[#allocation5 + $0x13c] sm:$0xf]
    %v171 = vld [vmem:[#allocation5 + $0x140] sm:$0xf]
    %v172 = vld [vmem:[#allocation5 + $0x144] sm:$0xf]
    %v173 = vld [vmem:[#allocation5 + $0x148] sm:$0xf]
    %v174 = vld [vmem:[#allocation5 + $0x14c] sm:$0xf]
    %v175 = vld [vmem:[#allocation5 + $0x150] sm:$0xf]
    %v176 = vld [vmem:[#allocation5 + $0x154] sm:$0xf]
    %v177 = vld [vmem:[#allocation5 + $0x158] sm:$0xf]
    %v178 = vld [vmem:[#allocation5 + $0x15c] sm:$0xf]
    %v179 = vld [vmem:[#allocation5 + $0x160] sm:$0xf]
    %v180 = vld [vmem:[#allocation5 + $0x164] sm:$0xf]
    %v181 = vld [vmem:[#allocation5 + $0x168] sm:$0xf]
    %v182 = vld [vmem:[#allocation5 + $0x16c] sm:$0xf]
    %v183 = vld [vmem:[#allocation5 + $0x170] sm:$0xf]
    %v184 = vld [vmem:[#allocation5 + $0x174] sm:$0xf]
    %v185 = vld [vmem:[#allocation5 + $0x178] sm:$0xf]
    %v186 = vld [vmem:[#allocation5 + $0x17c] sm:$0xf]
    %v187 = vld [vmem:[#allocation5 + $0x180] sm:$0xf]
    %v188 = vld [vmem:[#allocation5 + $0x184] sm:$0xf]
    %v189 = vld [vmem:[%s2] sm:$0x1]
    %v191 = vlaneseq
    %v192 = vshrl.u32 %v191, 7
    %v193 = vsub.s32 0, %v192
    %v194 = vrot.slane %v189, %v193
    %v204 = vunpack.c.l.b16 %v83
    %v205 = vunpack.c.h.b16 %v83
    %v206 = vunpack.c.l.b16 %v84
    %v207 = vunpack.c.h.b16 %v84
    %v208 = vunpack.c.l.b16 %v85
    %v209 = vunpack.c.h.b16 %v85
    %v210 = vunpack.c.l.b16 %v86
    %v211 = vunpack.c.l.b16 %v87
    %v212 = vunpack.c.h.b16 %v87
    %v213 = vunpack.c.l.b16 %v88
    %v214 = vunpack.c.h.b16 %v88
    %v215 = vunpack.c.l.b16 %v89
    %v216 = vunpack.c.h.b16 %v89
    %v217 = vunpack.c.l.b16 %v90
    %v218 = vpack.c.b16 %v211, %v204
    %v219 = vpack.c.b16 %v212, %v205
    %v220 = vpack.c.b16 %v213, %v206
    %v221 = vpack.c.b16 %v214, %v207
    %v222 = vpack.c.b16 %v215, %v208
    %v223 = vpack.c.b16 %v216, %v209
    %v224 = vpack.c.b16 %v217, %v210
    %v329 = vunpack.c.l.b16 %v91
    %v330 = vunpack.c.l.b16 %v92
    %v331 = vunpack.c.l.b16 %v93
    %v332 = vunpack.c.l.b16 %v94
    %v333 = vunpack.c.l.b16 %v95
    %v334 = vunpack.c.l.b16 %v96
    %v335 = vunpack.c.l.b16 %v97
    %v336 = vunpack.c.l.b16 %v98
    %v337 = vunpack.c.l.b16 %v99
    %v338 = vunpack.c.l.b16 %v100
    %v339 = vunpack.c.l.b16 %v101
    %v340 = vunpack.c.l.b16 %v102
    %v341 = vunpack.c.l.b16 %v103
    %v342 = vunpack.c.l.b16 %v104
    %v343 = vunpack.c.l.b16 %v105
    %v344 = vunpack.c.l.b16 %v106
    %v345 = vunpack.c.l.b16 %v107
    %v346 = vunpack.c.l.b16 %v108
    %v347 = vunpack.c.l.b16 %v109
    %v348 = vunpack.c.l.b16 %v110
    %v349 = vunpack.c.l.b16 %v111
    %v350 = vunpack.c.l.b16 %v112
    %v351 = vunpack.c.l.b16 %v113
    %v352 = vunpack.c.l.b16 %v114
    %v353 = vunpack.c.l.b16 %v115
    %v354 = vunpack.c.l.b16 %v116
    %v355 = vunpack.c.l.b16 %v117
    %v356 = vunpack.c.l.b16 %v118
    %v357 = vunpack.c.l.b16 %v119
    %v358 = vunpack.c.l.b16 %v120
    %v359 = vunpack.c.l.b16 %v121
    %v360 = vunpack.c.l.b16 %v122
    %v361 = vunpack.c.l.b16 %v123
    %v362 = vunpack.c.l.b16 %v124
    %v363 = vunpack.c.l.b16 %v125
    %v364 = vunpack.c.l.b16 %v126
    %v365 = vunpack.c.l.b16 %v127
    %v366 = vunpack.c.l.b16 %v128
    %v367 = vunpack.c.l.b16 %v129
    %v368 = vunpack.c.l.b16 %v130
    %v369 = vunpack.c.l.b16 %v131
    %v370 = vunpack.c.l.b16 %v132
    %v371 = vunpack.c.l.b16 %v133
    %v372 = vunpack.c.l.b16 %v134
    %v373 = vunpack.c.l.b16 %v135
    %v374 = vunpack.c.l.b16 %v136
    %v375 = vunpack.c.l.b16 %v137
    %v376 = vunpack.c.l.b16 %v138
    %v377 = vunpack.c.l.b16 %v139
    %v378 = vunpack.c.l.b16 %v140
    %v379 = vunpack.c.l.b16 %v141
    %v380 = vunpack.c.l.b16 %v142
    %v381 = vunpack.c.l.b16 %v143
    %v382 = vunpack.c.l.b16 %v144
    %v383 = vunpack.c.l.b16 %v145
    %v384 = vunpack.c.l.b16 %v146
    %v385 = vunpack.c.l.b16 %v147
    %v386 = vunpack.c.l.b16 %v148
    %v387 = vunpack.c.l.b16 %v149
    %v388 = vunpack.c.l.b16 %v150
    %v389 = vunpack.c.l.b16 %v151
    %v390 = vunpack.c.l.b16 %v152
    %v391 = vunpack.c.l.b16 %v153
    %v392 = vunpack.c.l.b16 %v154
    %v393 = vunpack.c.l.b16 %v155
    %v394 = vunpack.c.l.b16 %v156
    %v395 = vunpack.c.l.b16 %v157
    %v396 = vunpack.c.l.b16 %v158
    %v397 = vunpack.c.l.b16 %v159
    %v398 = vunpack.c.l.b16 %v160
    %v399 = vunpack.c.l.b16 %v161
    %v400 = vunpack.c.l.b16 %v162
    %v401 = vunpack.c.l.b16 %v163
    %v402 = vunpack.c.l.b16 %v164
    %v403 = vunpack.c.l.b16 %v165
    %v404 = vunpack.c.l.b16 %v166
    %v405 = vunpack.c.l.b16 %v167
    %v406 = vunpack.c.l.b16 %v168
    %v407 = vunpack.c.l.b16 %v169
    %v408 = vunpack.c.l.b16 %v170
    %v409 = vunpack.c.l.b16 %v171
    %v410 = vunpack.c.l.b16 %v172
    %v411 = vunpack.c.l.b16 %v173
    %v412 = vunpack.c.l.b16 %v174
    %v413 = vunpack.c.l.b16 %v175
    %v414 = vunpack.c.l.b16 %v176
    %v415 = vunpack.c.l.b16 %v177
    %v416 = vunpack.c.l.b16 %v178
    %v417 = vunpack.c.l.b16 %v179
    %v418 = vunpack.c.l.b16 %v180
    %v419 = vunpack.c.l.b16 %v181
    %v420 = vunpack.c.l.b16 %v182
    %v421 = vunpack.c.l.b16 %v183
    %v422 = vunpack.c.l.b16 %v184
    %v423 = vunpack.c.l.b16 %v185
    %v424 = vunpack.c.l.b16 %v186
    %v425 = vunpack.c.l.b16 %v187
    %v426 = vunpack.c.l.b16 %v188
    %v427 = vpack.c.b16 %v330, %v329
    %v428 = vpack.c.b16 %v332, %v331
    %v429 = vpack.c.b16 %v334, %v333
    %v430 = vpack.c.b16 %v336, %v335
    %v431 = vpack.c.b16 %v338, %v337
    %v432 = vpack.c.b16 %v340, %v339
    %v433 = vpack.c.b16 %v342, %v341
    %v434 = vpack.c.b16 %v344, %v343
    %v435 = vpack.c.b16 %v346, %v345
    %v436 = vpack.c.b16 %v348, %v347
    %v437 = vpack.c.b16 %v350, %v349
    %v438 = vpack.c.b16 %v352, %v351
    %v439 = vpack.c.b16 %v354, %v353
    %v440 = vpack.c.b16 %v356, %v355
    %v441 = vpack.c.b16 %v358, %v357
    %v442 = vpack.c.b16 %v360, %v359
    %v443 = vpack.c.b16 %v362, %v361
    %v444 = vpack.c.b16 %v364, %v363
    %v445 = vpack.c.b16 %v366, %v365
    %v446 = vpack.c.b16 %v368, %v367
    %v447 = vpack.c.b16 %v370, %v369
    %v448 = vpack.c.b16 %v372, %v371
    %v449 = vpack.c.b16 %v374, %v373
    %v450 = vpack.c.b16 %v376, %v375
    %v451 = vpack.c.b16 %v378, %v377
    %v452 = vpack.c.b16 %v380, %v379
    %v453 = vpack.c.b16 %v382, %v381
    %v454 = vpack.c.b16 %v384, %v383
    %v455 = vpack.c.b16 %v386, %v385
    %v456 = vpack.c.b16 %v388, %v387
    %v457 = vpack.c.b16 %v390, %v389
    %v458 = vpack.c.b16 %v392, %v391
    %v459 = vpack.c.b16 %v394, %v393
    %v460 = vpack.c.b16 %v396, %v395
    %v461 = vpack.c.b16 %v398, %v397
    %v462 = vpack.c.b16 %v400, %v399
    %v463 = vpack.c.b16 %v402, %v401
    %v464 = vpack.c.b16 %v404, %v403
    %v465 = vpack.c.b16 %v406, %v405
    %v466 = vpack.c.b16 %v408, %v407
    %v467 = vpack.c.b16 %v410, %v409
    %v468 = vpack.c.b16 %v412, %v411
    %v469 = vpack.c.b16 %v414, %v413
    %v470 = vpack.c.b16 %v416, %v415
    %v471 = vpack.c.b16 %v418, %v417
    %v472 = vpack.c.b16 %v420, %v419
    %v473 = vpack.c.b16 %v422, %v421
    %v474 = vpack.c.b16 %v424, %v423
    %v475 = vpack.c.b16 %v426, %v425
    %vm525 = vcmask 130048
    %v527 = vsel %vm525, %v224, 0
    %529 = vmatprep.subr.bf16.mxu0 0
    %530 = vmatpush1.bf16.msra.mxu0 %v427
    %531 = vmatprep.subr.bf16.mxu0 0
    %532 = vmatpush1.bf16.msra.mxu0 %v428
    %533 = vmatprep.subr.bf16.mxu0 0
    %534 = vmatpush1.bf16.msra.mxu0 %v429
    %535 = vmatprep.subr.bf16.mxu0 0
    %536 = vmatpush1.bf16.msra.mxu0 %v430
    %537 = vmatprep.subr.bf16.mxu0 0
    %538 = vmatpush1.bf16.msra.mxu0 %v431
    %539 = vmatprep.subr.bf16.mxu0 0
    %540 = vmatpush1.bf16.msra.mxu0 %v432
    %541 = vmatprep.subr.bf16.mxu0 0
    %542 = vmatpush1.bf16.msra.mxu0 %v433
    %543 = vmatprep.subr.bf16.mxu0 0
    %544 = vmatpush1.bf16.msra.mxu0 %v434
    %545 = vmatprep.subr.bf16.mxu0 0
    %546 = vmatpush1.bf16.msra.mxu0 %v435
    %547 = vmatprep.subr.bf16.mxu0 0
    %548 = vmatpush1.bf16.msra.mxu0 %v436
    %549 = vmatprep.subr.bf16.mxu0 0
    %550 = vmatpush1.bf16.msra.mxu0 %v437
    %551 = vmatprep.subr.bf16.mxu0 0
    %552 = vmatpush1.bf16.msra.mxu0 %v438
    %553 = vmatprep.subr.bf16.mxu0 0
    %554 = vmatpush1.bf16.msra.mxu0 %v439
    %555 = vmatprep.subr.bf16.mxu0 0
    %556 = vmatpush1.bf16.msra.mxu0 %v440
    %557 = vmatprep.subr.bf16.mxu0 0
    %558 = vmatpush1.bf16.msra.mxu0 %v441
    %559 = vmatprep.subr.bf16.mxu0 0
    %560 = vmatpush1.bf16.msra.mxu0 %v442
    %561 = vmatprep.mubr.bf16.mxu0 %v219
    %562 = vmatmul.mubr.bf16.gmra.mrb[0].mxu0 %v218
    %v563 = vpop.f32.mrb[0].mxu0
    %v564 = vadd.f32 %v194, %v563
    %v565 = vpop.f32.mrb[0].mxu0
    %v566 = vpop.f32.mrb[0].mxu0
    %v567 = vadd.f32 %v194, %v566
    %v568 = vpop.f32.mrb[0].mxu0
    %569 = vdwg.mxu0
    %570 = vmatprep.subr.bf16.mxu0 0
    %571 = vmatpush1.bf16.msra.mxu0 %v443
    %572 = vmatprep.subr.bf16.mxu0 0
    %573 = vmatpush1.bf16.msra.mxu0 %v444
    %574 = vmatprep.subr.bf16.mxu0 0
    %575 = vmatpush1.bf16.msra.mxu0 %v445
    %576 = vmatprep.subr.bf16.mxu0 0
    %577 = vmatpush1.bf16.msra.mxu0 %v446
    %578 = vmatprep.subr.bf16.mxu0 0
    %579 = vmatpush1.bf16.msra.mxu0 %v447
    %580 = vmatprep.subr.bf16.mxu0 0
    %581 = vmatpush1.bf16.msra.mxu0 %v448
    %582 = vmatprep.subr.bf16.mxu0 0
    %583 = vmatpush1.bf16.msra.mxu0 %v449
    %584 = vmatprep.subr.bf16.mxu0 0
    %585 = vmatpush1.bf16.msra.mxu0 %v450
    %586 = vmatprep.subr.bf16.mxu0 0
    %587 = vmatpush1.bf16.msra.mxu0 %v451
    %588 = vmatprep.subr.bf16.mxu0 0
    %589 = vmatpush1.bf16.msra.mxu0 %v452
    %590 = vmatprep.subr.bf16.mxu0 0
    %591 = vmatpush1.bf16.msra.mxu0 %v453
    %592 = vmatprep.subr.bf16.mxu0 0
    %593 = vmatpush1.bf16.msra.mxu0 %v454
    %594 = vmatprep.subr.bf16.mxu0 0
    %595 = vmatpush1.bf16.msra.mxu0 %v455
    %596 = vmatprep.subr.bf16.mxu0 0
    %597 = vmatpush1.bf16.msra.mxu0 %v456
    %598 = vmatprep.subr.bf16.mxu0 0
    %599 = vmatpush1.bf16.msra.mxu0 %v457
    %600 = vmatprep.subr.bf16.mxu0 0
    %601 = vmatpush1.bf16.msra.mxu0 %v458
    %602 = vmatprep.mubr.bf16.mxu0 %v221
    %603 = vmatmul.mubr.bf16.gmra.mrb[0].mxu0 %v220
    %v604 = vpop.f32.mrb[0].mxu0
    %v605 = vadd.f32 %v564, %v604
    %v606 = vpop.f32.mrb[0].mxu0
    %v607 = vpop.f32.mrb[0].mxu0
    %v608 = vadd.f32 %v567, %v607
    %v609 = vpop.f32.mrb[0].mxu0
    %610 = vdwg.mxu0
    %611 = vmatprep.subr.bf16.mxu0 0
    %612 = vmatpush1.bf16.msra.mxu0 %v459
    %613 = vmatprep.subr.bf16.mxu0 0
    %614 = vmatpush1.bf16.msra.mxu0 %v460
    %615 = vmatprep.subr.bf16.mxu0 0
    %616 = vmatpush1.bf16.msra.mxu0 %v461
    %617 = vmatprep.subr.bf16.mxu0 0
    %618 = vmatpush1.bf16.msra.mxu0 %v462
    %619 = vmatprep.subr.bf16.mxu0 0
    %620 = vmatpush1.bf16.msra.mxu0 %v463
    %621 = vmatprep.subr.bf16.mxu0 0
    %622 = vmatpush1.bf16.msra.mxu0 %v464
    %623 = vmatprep.subr.bf16.mxu0 0
    %624 = vmatpush1.bf16.msra.mxu0 %v465
    %625 = vmatprep.subr.bf16.mxu0 0
    %626 = vmatpush1.bf16.msra.mxu0 %v466
    %627 = vmatprep.subr.bf16.mxu0 0
    %628 = vmatpush1.bf16.msra.mxu0 %v467
    %629 = vmatprep.subr.bf16.mxu0 0
    %630 = vmatpush1.bf16.msra.mxu0 %v468
    %631 = vmatprep.subr.bf16.mxu0 0
    %632 = vmatpush1.bf16.msra.mxu0 %v469
    %633 = vmatprep.subr.bf16.mxu0 0
    %634 = vmatpush1.bf16.msra.mxu0 %v470
    %635 = vmatprep.subr.bf16.mxu0 0
    %636 = vmatpush1.bf16.msra.mxu0 %v471
    %637 = vmatprep.subr.bf16.mxu0 0
    %638 = vmatpush1.bf16.msra.mxu0 %v472
    %639 = vmatprep.subr.bf16.mxu0 0
    %640 = vmatpush1.bf16.msra.mxu0 %v473
    %641 = vmatprep.subr.bf16.mxu0 0
    %642 = vmatpush1.bf16.msra.mxu0 %v474
    %643 = vmatprep.mubr.bf16.mxu0 %v223
    %644 = vmatmul.mubr.bf16.gmra.mrb[0].mxu0 %v222
    %v645 = vpop.f32.mrb[0].mxu0
    %v646 = vadd.f32 %v605, %v645
    %v647 = vpop.f32.mrb[0].mxu0
    %v648 = vpop.f32.mrb[0].mxu0
    %v649 = vadd.f32 %v608, %v648
    %v650 = vpop.f32.mrb[0].mxu0
    %651 = vdwg.mxu0
    %652 = vmatprep.subr.bf16.mxu0 0
    %653 = vmatpush1.bf16.msra.mxu0 %v475
    %654 = vmatprep.subr.bf16.mxu0 0
    %655 = vmatpush1.bf16.msra.mxu0 0
    %656 = vmatprep.subr.bf16.mxu0 0
    %657 = vmatpush1.bf16.msra.mxu0 0
    %658 = vmatprep.subr.bf16.mxu0 0
    %659 = vmatpush1.bf16.msra.mxu0 0
    %660 = vmatprep.subr.bf16.mxu0 0
    %661 = vmatpush1.bf16.msra.mxu0 0
    %662 = vmatprep.subr.bf16.mxu0 0
    %663 = vmatpush1.bf16.msra.mxu0 0
    %664 = vmatprep.subr.bf16.mxu0 0
    %665 = vmatpush1.bf16.msra.mxu0 0
    %666 = vmatprep.subr.bf16.mxu0 0
    %667 = vmatpush1.bf16.msra.mxu0 0
    %668 = vmatprep.subr.bf16.mxu0 0
    %669 = vmatpush1.bf16.msra.mxu0 0
    %670 = vmatprep.subr.bf16.mxu0 0
    %671 = vmatpush1.bf16.msra.mxu0 0
    %672 = vmatprep.subr.bf16.mxu0 0
    %673 = vmatpush1.bf16.msra.mxu0 0
    %674 = vmatprep.subr.bf16.mxu0 0
    %675 = vmatpush1.bf16.msra.mxu0 0
    %676 = vmatprep.subr.bf16.mxu0 0
    %677 = vmatpush1.bf16.msra.mxu0 0
    %678 = vmatprep.subr.bf16.mxu0 0
    %679 = vmatpush1.bf16.msra.mxu0 0
    %680 = vmatprep.subr.bf16.mxu0 0
    %681 = vmatpush1.bf16.msra.mxu0 0
    %682 = vmatprep.subr.bf16.mxu0 0
    %683 = vmatpush1.bf16.msra.mxu0 0
    %684 = vmatprep.mubr.bf16.mxu0 0
    %685 = vmatmul.mubr.bf16.gmra.mrb[0].mxu0 %v527
    %v686 = vpop.f32.mrb[0].mxu0
    %v687 = vadd.f32 %v646, %v686
    %v688 = vpop.f32.mrb[0].mxu0
    %v689 = vpop.f32.mrb[0].mxu0
    %v690 = vadd.f32 %v649, %v689
    %v691 = vpop.f32.mrb[0].mxu0
    %692 = vdwg.mxu0
    %v693 = vmax.f32 %v687, 0.0
    %v694 = vmax.f32 %v690, 0.0
    %v695 = vpack.c.bf16 %v694, %v693
    %v696 = vld [vmem:[#allocation7] sm:$0xf]
    %v697 = vld [vmem:[#allocation7 + $0x4] sm:$0xf]
    %v698 = vld [vmem:[#allocation7 + $0x8] sm:$0xf]
    %v699 = vld [vmem:[#allocation7 + $0xc] sm:$0xf]
    %v700 = vld [vmem:[#allocation7 + $0x10] sm:$0xf]
    %v701 = vld [vmem:[#allocation7 + $0x14] sm:$0xf]
    %v702 = vld [vmem:[#allocation7 + $0x18] sm:$0xf]
    %v703 = vld [vmem:[#allocation7 + $0x1c] sm:$0xf]
    %v704 = vld [vmem:[#allocation7 + $0x20] sm:$0xf]
    %v705 = vld [vmem:[#allocation7 + $0x24] sm:$0xf]
    %v706 = vld [vmem:[#allocation7 + $0x28] sm:$0xf]
    %v707 = vld [vmem:[#allocation7 + $0x2c] sm:$0xf]
    %v708 = vld [vmem:[#allocation7 + $0x30] sm:$0xf]
    %v709 = vld [vmem:[#allocation7 + $0x34] sm:$0xf]
    %v710 = vld [vmem:[#allocation7 + $0x38] sm:$0xf]
    %v711 = vld [vmem:[#allocation7 + $0x3c] sm:$0xf]
    %v712 = vld [vmem:[%s4] sm:$0x1]
    %v714 = vlaneseq
    %v715 = vshrl.u32 %v714, 7
    %v716 = vsub.s32 0, %v715
    %v717 = vrot.slane %v712, %v716
    %v735 = vunpack.c.l.b16 %v696
    %v736 = vunpack.c.l.b16 %v697
    %v737 = vunpack.c.l.b16 %v698
    %v738 = vunpack.c.l.b16 %v699
    %v739 = vunpack.c.l.b16 %v700
    %v740 = vunpack.c.l.b16 %v701
    %v741 = vunpack.c.l.b16 %v702
    %v742 = vunpack.c.l.b16 %v703
    %v743 = vunpack.c.l.b16 %v704
    %v744 = vunpack.c.l.b16 %v705
    %v745 = vunpack.c.l.b16 %v706
    %v746 = vunpack.c.l.b16 %v707
    %v747 = vunpack.c.l.b16 %v708
    %v748 = vunpack.c.l.b16 %v709
    %v749 = vunpack.c.l.b16 %v710
    %v750 = vunpack.c.l.b16 %v711
    %v751 = vpack.c.b16 %v736, %v735
    %v752 = vpack.c.b16 %v738, %v737
    %v753 = vpack.c.b16 %v740, %v739
    %v754 = vpack.c.b16 %v742, %v741
    %v755 = vpack.c.b16 %v744, %v743
    %v756 = vpack.c.b16 %v746, %v745
    %v757 = vpack.c.b16 %v748, %v747
    %v758 = vpack.c.b16 %v750, %v749
    %767 = vmatprep.subr.bf16.mxu0 0
    %768 = vmatpush1.bf16.msra.mxu0 %v751
    %769 = vmatprep.subr.bf16.mxu0 0
    %770 = vmatpush1.bf16.msra.mxu0 %v752
    %771 = vmatprep.subr.bf16.mxu0 0
    %772 = vmatpush1.bf16.msra.mxu0 %v753
    %773 = vmatprep.subr.bf16.mxu0 0
    %774 = vmatpush1.bf16.msra.mxu0 %v754
    %775 = vmatprep.subr.bf16.mxu0 0
    %776 = vmatpush1.bf16.msra.mxu0 %v755
    %777 = vmatprep.subr.bf16.mxu0 0
    %778 = vmatpush1.bf16.msra.mxu0 %v756
    %779 = vmatprep.subr.bf16.mxu0 0
    %780 = vmatpush1.bf16.msra.mxu0 %v757
    %781 = vmatprep.subr.bf16.mxu0 0
    %782 = vmatpush1.bf16.msra.mxu0 %v758
    %783 = vmatprep.subr.bf16.mxu0 0
    %784 = vmatpush1.bf16.msra.mxu0 0
    %785 = vmatprep.subr.bf16.mxu0 0
    %786 = vmatpush1.bf16.msra.mxu0 0
    %787 = vmatprep.subr.bf16.mxu0 0
    %788 = vmatpush1.bf16.msra.mxu0 0
    %789 = vmatprep.subr.bf16.mxu0 0
    %790 = vmatpush1.bf16.msra.mxu0 0
    %791 = vmatprep.subr.bf16.mxu0 0
    %792 = vmatpush1.bf16.msra.mxu0 0
    %793 = vmatprep.subr.bf16.mxu0 0
    %794 = vmatpush1.bf16.msra.mxu0 0
    %795 = vmatprep.subr.bf16.mxu0 0
    %796 = vmatpush1.bf16.msra.mxu0 0
    %797 = vmatprep.subr.bf16.mxu0 0
    %798 = vmatpush1.bf16.msra.mxu0 0
    %799 = vmatprep.mubr.bf16.mxu0 0
    %800 = vmatmul.mubr.bf16.gmra.mrb[0].mxu0 %v695
    %v801 = vpop.f32.mrb[0].mxu0
    %v802 = vadd.f32 %v717, %v801
    %v803 = vpop.f32.mrb[0].mxu0
    %v804 = vpop.f32.mrb[0].mxu0
    %v805 = vadd.f32 %v717, %v804
    %v806 = vpop.f32.mrb[0].mxu0
    %807 = vdwg.mxu0
    %v808 = vmax.f32 %v802, 0.0
    %v809 = vmax.f32 %v805, 0.0
    %v810 = vpack.c.bf16 %v809, %v808
    %v811 = vld [vmem:[#allocation8] sm:$0xf]
    %v812 = vld [vmem:[#allocation8 + $0x4] sm:$0xf]
    %v813 = vld [vmem:[#allocation8 + $0x8] sm:$0xf]
    %v814 = vld [vmem:[#allocation8 + $0xc] sm:$0xf]
    %v815 = vld [vmem:[#allocation8 + $0x10] sm:$0xf]
    %v816 = vld [vmem:[#allocation8 + $0x14] sm:$0xf]
    %v817 = vld [vmem:[#allocation8 + $0x18] sm:$0xf]
    %v818 = vld [vmem:[#allocation8 + $0x1c] sm:$0xf]
    %v819 = vld [vmem:[#allocation8 + $0x20] sm:$0xf]
    %v820 = vld [vmem:[#allocation8 + $0x24] sm:$0xf]
    %v821 = vld [vmem:[#allocation8 + $0x28] sm:$0xf]
    %v822 = vld [vmem:[#allocation8 + $0x2c] sm:$0xf]
    %v823 = vld [vmem:[#allocation8 + $0x30] sm:$0xf]
    %v824 = vld [vmem:[#allocation8 + $0x34] sm:$0xf]
    %v825 = vld [vmem:[#allocation8 + $0x38] sm:$0xf]
    %v826 = vld [vmem:[#allocation8 + $0x3c] sm:$0xf]
    %v827 = vld [vmem:[%s6] sm:$0x1]
    %v829 = vlaneseq
    %v830 = vshrl.u32 %v829, 7
    %v831 = vsub.s32 0, %v830
    %v832 = vrot.slane %v827, %v831
    %v850 = vunpack.c.l.b16 %v811
    %v851 = vunpack.c.l.b16 %v812
    %v852 = vunpack.c.l.b16 %v813
    %v853 = vunpack.c.l.b16 %v814
    %v854 = vunpack.c.l.b16 %v815
    %v855 = vunpack.c.l.b16 %v816
    %v856 = vunpack.c.l.b16 %v817
    %v857 = vunpack.c.l.b16 %v818
    %v858 = vunpack.c.l.b16 %v819
    %v859 = vunpack.c.l.b16 %v820
    %v860 = vunpack.c.l.b16 %v821
    %v861 = vunpack.c.l.b16 %v822
    %v862 = vunpack.c.l.b16 %v823
    %v863 = vunpack.c.l.b16 %v824
    %v864 = vunpack.c.l.b16 %v825
    %v865 = vunpack.c.l.b16 %v826
    %v866 = vpack.c.b16 %v851, %v850
    %v867 = vpack.c.b16 %v853, %v852
    %v868 = vpack.c.b16 %v855, %v854
    %v869 = vpack.c.b16 %v857, %v856
    %v870 = vpack.c.b16 %v859, %v858
    %v871 = vpack.c.b16 %v861, %v860
    %v872 = vpack.c.b16 %v863, %v862
    %v873 = vpack.c.b16 %v865, %v864
    %882 = vmatprep.subr.bf16.mxu0 0
    %883 = vmatpush1.bf16.msra.mxu0 %v866
    %884 = vmatprep.subr.bf16.mxu0 0
    %885 = vmatpush1.bf16.msra.mxu0 %v867
    %886 = vmatprep.subr.bf16.mxu0 0
    %887 = vmatpush1.bf16.msra.mxu0 %v868
    %888 = vmatprep.subr.bf16.mxu0 0
    %889 = vmatpush1.bf16.msra.mxu0 %v869
    %890 = vmatprep.subr.bf16.mxu0 0
    %891 = vmatpush1.bf16.msra.mxu0 %v870
    %892 = vmatprep.subr.bf16.mxu0 0
    %893 = vmatpush1.bf16.msra.mxu0 %v871
    %894 = vmatprep.subr.bf16.mxu0 0
    %895 = vmatpush1.bf16.msra.mxu0 %v872
    %896 = vmatprep.subr.bf16.mxu0 0
    %897 = vmatpush1.bf16.msra.mxu0 %v873
    %898 = vmatprep.subr.bf16.mxu0 0
    %899 = vmatpush1.bf16.msra.mxu0 0
    %900 = vmatprep.subr.bf16.mxu0 0
    %901 = vmatpush1.bf16.msra.mxu0 0
    %902 = vmatprep.subr.bf16.mxu0 0
    %903 = vmatpush1.bf16.msra.mxu0 0
    %904 = vmatprep.subr.bf16.mxu0 0
    %905 = vmatpush1.bf16.msra.mxu0 0
    %906 = vmatprep.subr.bf16.mxu0 0
    %907 = vmatpush1.bf16.msra.mxu0 0
    %908 = vmatprep.subr.bf16.mxu0 0
    %909 = vmatpush1.bf16.msra.mxu0 0
    %910 = vmatprep.subr.bf16.mxu0 0
    %911 = vmatpush1.bf16.msra.mxu0 0
    %912 = vmatprep.subr.bf16.mxu0 0
    %913 = vmatpush1.bf16.msra.mxu0 0
    %914 = vmatprep.mubr.bf16.mxu0 0
    %915 = vmatmul.mubr.bf16.gmra.mrb[0].mxu0 %v810
    %v916 = vpop.f32.mrb[0].mxu0
    %v917 = vadd.f32 %v832, %v916
    %v918 = vpop.f32.mrb[0].mxu0
    %v919 = vpop.f32.mrb[0].mxu0
    %v920 = vadd.f32 %v832, %v919
    %v921 = vpop.f32.mrb[0].mxu0
    %922 = vdwg.mxu0
    %v923 = vxor.u32 %v917, 2147483648
    %v924 = vxor.u32 %v920, 2147483648
    %v925 = vmul.f32 %v923, 1.442695
    %v926 = vpow.pop %v925
    %v927 = vmul.f32 %v924, 1.442695
    %v928 = vpow.pop %v927
    %v929 = vadd.f32 %v926, 1.0
    %v930 = vadd.f32 %v928, 1.0
    %v931 = vrcp.pop %v929
    %v932 = vmul.f32 1.0, %v931
    %v933 = vrcp.pop %v930
    %v934 = vmul.f32 1.0, %v933
    %935 = vst [vmem:[#allocation10] sm:$0xff] %v932
    %936 = vst [vmem:[#allocation10 + $0x8] sm:$0xff] %v934
    // Predicated region
    $region46: #{tpu_custom_call.1} parent=1 // pred_check
      _
    $region47: #{tpu_custom_call.1} parent=1 // pred_check_branch
      %938 = sbr.rel (0) target = $region49
    $region48: #{tpu_custom_call.1} parent=1 // pred_region
      %s940 = ssub.s32 256, 256
      %941 = vsyncadd [#allocation4], %s940
      %s942 = sshll.u32 [#allocation10], 4
      %s943 = int_to_ptr.vmem [resolvable:$true] %s942
      %948 = dma.vmem_to_hbm [thread:$0]  %s943, 256, %s7, [#allocation4], 128, 128, 8
    $region49: #{tpu_custom_call.1} parent=1 // pred_fallthru
      _
    // Predicated region
    $region50: #{tpu_custom_call.1} parent=1 // pred_check
      _
    $region51: #{tpu_custom_call.1} parent=1 // pred_check_branch
      %950 = sbr.rel (0) target = $region53
    $region52: #{tpu_custom_call.1} parent=1 // pred_region
      %951 = dma.done [#allocation4], 256
    $region53: #{tpu_custom_call.1} parent=1 // pred_fallthru
      _
    %952 = vsyncpa [#allocation3], 1
    %953 = vsyncpa [#allocation6], 1
    %954 = vsyncpa [#allocation9], 1
    %955 = vsyncpa [#allocation4], 1

</llo_original>
